<compile_context>
chip_gen: v7x
topology: tpu7x:2x2x1
jax: 0.10.0
libtpu: 0.0.40
codegen_flags: <defaults>
</compile_context>

<pallas_src>
import numpy as np
import jax
import jax.numpy as jnp
from jax.experimental import pallas as pl
from jax.experimental.pallas import tpu as pltpu

# ---------------- configuration (small synthetic shapes) ----------------
IN_CHANNELS = 4
OUT_CHANNELS = 8
FEATMAP_STRIDES = [4]
POINT_NUM = 14
OUTPUT_SIZE = (8, 32)          # (out_h, out_w)
B, H, W = 2, 16, 16            # feats[0] spatial size
SCALE_FACTOR = 4               # as hard-coded in the PyTorch forward
BN_EPS = 1e-5
F_PTS = POINT_NUM
FP3 = POINT_NUM + 3
N_OUT = OUTPUT_SIZE[0] * OUTPUT_SIZE[1]   # 256 output sample points
HW = H * W                                # 256 feature-map pixels
COL9 = 9 * IN_CHANNELS


# ---------------- GridGenerator constants (pure numpy, deterministic) ----------------
def _build_C(F):
    ctrl_pts_x = np.linspace(-1.0, 1.0, F // 2)
    top = np.stack([ctrl_pts_x, -np.ones(F // 2)], axis=1)
    bot = np.stack([ctrl_pts_x, np.ones(F // 2)], axis=1)
    return np.concatenate([top, bot], axis=0)                      # (F, 2)


def _build_inv_delta_C(F, C):
    hat_C = np.zeros((F, F))
    for i in range(F):
        for j in range(i, F):
            r = np.linalg.norm(C[i] - C[j])
            hat_C[i, j] = r
            hat_C[j, i] = r
    np.fill_diagonal(hat_C, 1)
    hat_C = (hat_C ** 2) * np.log(hat_C)
    delta_C = np.concatenate([
        np.concatenate([np.ones((F, 1)), C, hat_C], axis=1),
        np.concatenate([np.zeros((2, 3)), C.T], axis=1),
        np.concatenate([np.zeros((1, 3)), np.ones((1, F))], axis=1)],
        axis=0)
    return np.linalg.inv(delta_C)                                   # (F+3, F+3)


def _build_P(w, h):
    gx = (np.arange(-w, w, 2) + 1.0) / w
    gy = (np.arange(-h, h, 2) + 1.0) / h
    P = np.stack(np.meshgrid(gx, gy), axis=2)                       # (h, w, 2)
    return P.reshape(-1, 2)                                         # (h*w, 2), row = y*w + x


def _build_P_hat(F, C, P, eps=1e-6):
    n = P.shape[0]
    P_diff = np.tile(P[:, None, :], (1, F, 1)) - C[None]
    rbf_norm = np.linalg.norm(P_diff, axis=2)
    rbf = (rbf_norm ** 2) * np.log(rbf_norm + eps)
    return np.concatenate([np.ones((n, 1)), P, rbf], axis=1)        # (n, F+3)


_C = _build_C(F_PTS)
_INV_DELTA_C = _build_inv_delta_C(F_PTS, _C)                        # (17, 17)
_P_HAT = _build_P_hat(F_PTS, _C, _build_P(OUTPUT_SIZE[1], OUTPUT_SIZE[0]))  # (256, 17)
# TPS transform hoisted out of the per-ROI grid: P' = (P_hat @ inv_delta_C) @ [C'; 0]
PHAT_INVC = (_P_HAT @ _INV_DELTA_C).astype(np.float32)              # (N_OUT, FP3)

# Constant (HW, N_OUT) row-index matrix (row[i, :] == i), DMA'd once into the kernel.
ROW_IOTA = np.ascontiguousarray(
    np.broadcast_to(np.arange(HW, dtype=np.float32)[:, None], (HW, N_OUT)))


# ------- Pallas kernel 1: conv3x3 + BN(eval) + ReLU, lane-dense (Cout, HW) -------
def conv_bn_relu_kernel(x_ref, w_ref, o_ref):
    # (Cout, 9Cin+1) @ (9Cin+1, HW) -> (Cout, HW).
    # BN scale is folded into the weights, conv bias + BN shift folded into the
    # augmented last column/row (host side), so the body is matmul + relu only.
    o_ref[0] = jnp.maximum(
        jnp.dot(w_ref[...], x_ref[0], preferred_element_type=jnp.float32), 0.0)


def conv_bn_relu(x_nchw, conv_w, conv_b, gamma, beta, mean, var):
    """Returns the feature map in (B, OUT_CHANNELS, H*W) float32 (lane-dense HW)."""
    x = jnp.transpose(x_nchw, (0, 2, 3, 1)).astype(jnp.float32)      # NHWC (force_fp32)
    xpad = jnp.pad(x, ((0, 0), (1, 1), (1, 1), (0, 0)))
    cols = [xpad[:, dy:dy + H, dx:dx + W, :] for dy in range(3) for dx in range(3)]
    xcol = jnp.concatenate(cols, axis=-1).reshape(B, HW, COL9)       # (B, HW, 9Cin)
    xcol_t = jnp.transpose(xcol, (0, 2, 1))                          # (B, 9Cin, HW)
    x_aug = jnp.concatenate([xcol_t, jnp.ones((B, 1, HW), jnp.float32)], axis=1)

    scale = gamma / jnp.sqrt(var + BN_EPS)                           # (Cout,)
    shift = (conv_b - mean) * scale + beta                           # (Cout,) folds bias + BN
    wcol_t = jnp.transpose(conv_w, (0, 2, 3, 1)).reshape(OUT_CHANNELS, COL9)  # (Cout, 9Cin)
    w_scaled = wcol_t * scale[:, None]                               # fold BN scale
    w_aug = jnp.concatenate([w_scaled, shift[:, None]], axis=1)      # (Cout, 9Cin+1)

    out = pl.pallas_call(
        conv_bn_relu_kernel,
        out_shape=jax.ShapeDtypeStruct((B, OUT_CHANNELS, HW), jnp.float32),
        grid_spec=pl.GridSpec(
            grid=(B,),
            in_specs=[pl.BlockSpec((1, COL9 + 1, HW), lambda b: (b, 0, 0)),
                      pl.BlockSpec((OUT_CHANNELS, COL9 + 1), lambda b: (0, 0))],
            out_specs=pl.BlockSpec((1, OUT_CHANNELS, HW), lambda b: (b, 0, 0))),
        compiler_params=pltpu.CompilerParams(dimension_semantics=("parallel",)),
    )(x_aug, w_aug)
    return out


# ---- Pallas kernel 2: bilinear grid_sample as lane-dense one-hot-weight matmul ----
def tps_sample_kernel(bidx_ref, cdat_ref, iota_ref, feat_ref, out_ref):
    del bidx_ref                      # only used in the index_maps
    cd = cdat_ref[0]                  # (8, N_OUT): rows 0-3 flat corner idx, rows 4-7 weights
    row = iota_ref[...]               # (HW, N_OUT): row[i, :] == i (constant, DMA'd once)
    # Colliding clamped corners (border padding) correctly sum their weights.
    wmat = (jnp.where(row == cd[0:1, :], cd[4:5, :], 0.0)
            + jnp.where(row == cd[1:2, :], cd[5:6, :], 0.0)
            + jnp.where(row == cd[2:3, :], cd[6:7, :], 0.0)
            + jnp.where(row == cd[3:4, :], cd[7:8, :], 0.0))         # (HW, N_OUT)
    # (Cout, HW) @ (HW, N_OUT) -> (Cout, N_OUT): full-width MXU N dim, unmasked
    # lane-dense stores; the reshape to (out_h, out_w) in the wrapper is free.
    out_ref[0] = jnp.dot(feat_ref[0], wmat, preferred_element_type=jnp.float32)
    # NOTE: at production feature-map sizes (HW >> 256) the (HW, N_OUT) one-hot
    # must be built/accumulated in HW chunks to bound VMEM (esp. v7x 64 MiB).


# ---------------- forward (mirrors TPSRoIExtractor.forward) ----------------
def tps_roi_extractor_forward(feats, fiducial_points, params):
    conv_w, conv_b, gamma, beta, mean, var = params
    feat_t = conv_bn_relu(feats[0], conv_w, conv_b, gamma, beta, mean, var)  # (B, Cout, HW)

    # Per-instance scalar prep (x1/x2/y1/y2, normalization) is host-side python
    # scalar work in the PyTorch code too; the TPS transform and bilinear corner
    # index/weight math are hoisted here so the kernel grid only does the matmul.
    cdat_list, bidx_list = [], []
    for b, points in enumerate(fiducial_points):
        if len(points) == 0:
            continue
        points = np.asarray(points, np.float32) / SCALE_FACTOR
        for point in points:
            point = point.copy()
            point[:, 0] = np.clip(point[:, 0], 0, W)
            point[:, 1] = np.clip(point[:, 1], 0, H)
            x1 = int(point[:, 0].min()); x2 = int(point[:, 0].max()) + 1
            y1 = int(point[:, 1].min()); y2 = int(point[:, 1].max()) + 1
            pn = point.copy()
            pn[:, 0] = 2.0 * (point[:, 0] - x1) / (x2 - x1) - 1.0
            pn[:, 1] = 2.0 * (point[:, 1] - y1) / (y2 - y1) - 1.0
            pts_aug = np.concatenate([pn, np.zeros((3, 2), np.float32)], axis=0)  # (F+3, 2)
            pp = PHAT_INVC @ pts_aug                                  # (N_OUT, 2) TPS grid
            gx, gy = pp[:, 0], pp[:, 1]
            # python slicing clamps the crop to the map -> grid_sample input size:
            w_in = min(x2, W) - x1
            h_in = min(y2, H) - y1
            # grid_sample unnormalize (align_corners=False) + padding_mode='border'
            ix = np.clip(((gx + 1.0) * w_in - 1.0) * 0.5, 0.0, w_in - 1.0)
            iy = np.clip(((gy + 1.0) * h_in - 1.0) * 0.5, 0.0, h_in - 1.0)
            ix0 = np.floor(ix); iy0 = np.floor(iy)
            wx = (ix - ix0).astype(np.float32); wy = (iy - iy0).astype(np.float32)
            ix0 = ix0.astype(np.int64); iy0 = iy0.astype(np.int64)
            ix1 = np.minimum(ix0 + 1, w_in - 1); iy1 = np.minimum(iy0 + 1, h_in - 1)
            fx0 = ix0 + x1; fx1 = ix1 + x1                            # crop -> full-map coords
            fy0 = iy0 + y1; fy1 = iy1 + y1
            cdat = np.stack([
                fy0 * W + fx0, fy0 * W + fx1, fy1 * W + fx0, fy1 * W + fx1,
                (1.0 - wy) * (1.0 - wx), (1.0 - wy) * wx, wy * (1.0 - wx), wy * wx,
            ]).astype(np.float32)                                     # (8, N_OUT)
            cdat_list.append(cdat)
            bidx_list.append(b)

    K = len(cdat_list)
    corner_data = jnp.asarray(np.stack(cdat_list))                    # (K, 8, N_OUT)
    bidx = jnp.asarray(np.array(bidx_list, np.int32))                 # (K,), grouped by batch
    row_iota = jnp.asarray(ROW_IOTA)                                  # (HW, N_OUT)

    roi = pl.pallas_call(
        tps_sample_kernel,
        out_shape=jax.ShapeDtypeStruct((K, OUT_CHANNELS, N_OUT), jnp.float32),
        grid_spec=pltpu.PrefetchScalarGridSpec(
            num_scalar_prefetch=1,
            grid=(K,),
            in_specs=[pl.BlockSpec((1, 8, N_OUT), lambda k, bi: (k, 0, 0)),
                      pl.BlockSpec((HW, N_OUT), lambda k, bi: (0, 0)),
                      pl.BlockSpec((1, OUT_CHANNELS, HW), lambda k, bi: (bi[k], 0, 0))],
            out_specs=pl.BlockSpec((1, OUT_CHANNELS, N_OUT), lambda k, bi: (k, 0, 0))),
        compiler_params=pltpu.CompilerParams(dimension_semantics=("parallel",)),
    )(bidx, corner_data, row_iota, feat_t)

    # (K, Cout, N_OUT) -> (K, Cout, out_h, out_w): free reshape (row n = y*out_w + x).
    out_h, out_w = OUTPUT_SIZE
    roi = roi.reshape(K, OUT_CHANNELS, out_h, out_w)
    # NOTE: @force_fp32(out_fp16=True) only casts when fp16 mode is enabled in mmdet;
    # default behaviour (fp16 disabled) returns float32, which we match here.
    return roi


# ---------------- deterministic parameters & example inputs ----------------
if __name__ == "__main__":
    key = jax.random.PRNGKey(0)
    kf, k1, k2, k3, k4, k5, k6 = jax.random.split(key, 7)

    conv_w = 0.1 * jax.random.normal(k1, (OUT_CHANNELS, IN_CHANNELS, 3, 3), jnp.float32)
    conv_b = 0.1 * jax.random.normal(k2, (OUT_CHANNELS,), jnp.float32)
    bn_gamma = 1.0 + 0.1 * jax.random.normal(k3, (OUT_CHANNELS,), jnp.float32)
    bn_beta = 0.1 * jax.random.normal(k4, (OUT_CHANNELS,), jnp.float32)
    bn_mean = 0.1 * jax.random.normal(k5, (OUT_CHANNELS,), jnp.float32)
    bn_var = jnp.abs(1.0 + 0.1 * jax.random.normal(k6, (OUT_CHANNELS,), jnp.float32))
    params = (conv_w, conv_b, bn_gamma, bn_beta, bn_mean, bn_var)

    feats0 = jax.random.normal(kf, (B, IN_CHANNELS, H, W), jnp.float32)

    # synthetic fiducial points in IMAGE coordinates (image = 4 * feature size = 64x64),
    # 7 top points (L->R) then 7 bottom points (L->R) per instance.
    half = POINT_NUM // 2

    def make_points(xl, xr, yt, yb, amp):
        xs = np.linspace(xl, xr, half)
        bend = amp * np.sin(np.linspace(0.0, np.pi, half))
        top = np.stack([xs, yt + bend], axis=1)
        bot = np.stack([xs, yb + bend], axis=1)
        return np.concatenate([top, bot], axis=0).astype(np.float32)   # (14, 2)

    fiducial_points = [
        np.stack([make_points(6.0, 58.0, 10.0, 26.0, 3.0),
                  make_points(10.0, 50.0, 34.0, 52.0, -2.0)], axis=0),   # batch 0: 2 instances
        np.stack([make_points(4.0, 60.0, 20.0, 44.0, 4.0)], axis=0),     # batch 1: 1 instance
    ]

    out = tps_roi_extractor_forward([feats0], fiducial_points, params)
    out = jax.block_until_ready(out)

    assert out.shape == (3, OUT_CHANNELS, OUTPUT_SIZE[0], OUTPUT_SIZE[1]), out.shape
    assert bool(jnp.all(jnp.isfinite(out)))
    print("KERNEL_OK")
</pallas_src>

<mosaic_0001>
module attributes {stable_mosaic.version = 11 : i64} {
  func.func @conv_bn_relu_kernel(%arg0: i32, %arg1: memref<1x37x256xf32, #tpu.memory_space<vmem>>, %arg2: memref<8x37xf32, #tpu.memory_space<vmem>>, %arg3: memref<1x8x256xf32, #tpu.memory_space<vmem>>) attributes {dimension_semantics = [#tpu.dimension_semantics<parallel>], iteration_bounds = array<i64: 2>, scalar_prefetch = 0 : i64, scratch_operands = 0 : i64, tpu.core_type = #tpu.core_type<tc>, window_params = [{transform_indices = @transform_0, window_bounds = array<i64: 1, 37, 256>}, {pipeline_mode = #tpu.pipeline_mode<synchronous>, transform_indices = @transform_1, window_bounds = array<i64: 8, 37>}, {transform_indices = @transform_2, window_bounds = array<i64: 1, 8, 256>}]} {
    %c0 = arith.constant 0 : index
    %c0_0 = arith.constant 0 : index
    %0 = vector.load %arg2[%c0, %c0_0] : memref<8x37xf32, #tpu.memory_space<vmem>>, vector<8x37xf32>
    %c0_1 = arith.constant 0 : index
    %c0_2 = arith.constant 0 : index
    %c0_3 = arith.constant 0 : index
    %1 = vector.load %arg1[%c0_1, %c0_2, %c0_3] : memref<1x37x256xf32, #tpu.memory_space<vmem>>, vector<1x37x256xf32>
    %2 = vector.shape_cast %1 : vector<1x37x256xf32> to vector<37x256xf32>
    %cst = arith.constant dense<0.000000e+00> : vector<8x256xf32>
    %3 = tpu.matmul %0, %2, %cst {dimension_numbers = #tpu.dot_dimension_numbers<[1], [0], [0], [1], [0, 0, 1, 1], [], []>} : vector<8x37xf32>, vector<37x256xf32>, vector<8x256xf32> -> vector<8x256xf32>
    %cst_4 = arith.constant 0.000000e+00 : f32
    %4 = vector.broadcast %cst_4 : f32 to vector<8x256xf32>
    %5 = arith.maximumf %3, %4 : vector<8x256xf32>
    %c0_5 = arith.constant 0 : index
    %c0_6 = arith.constant 0 : index
    %c0_7 = arith.constant 0 : index
    %6 = vector.load %arg3[%c0_5, %c0_6, %c0_7] : memref<1x8x256xf32, #tpu.memory_space<vmem>>, vector<1x8x256xf32>
    %7 = vector.shape_cast %6 : vector<1x8x256xf32> to vector<8x256xf32>
    %8 = vector.shape_cast %5 : vector<8x256xf32> to vector<1x8x256xf32>
    tpu.vector_store %arg3[%c0_5, %c0_6, %c0_7], %8 {strides = array<i32>} : memref<1x8x256xf32, #tpu.memory_space<vmem>>, vector<1x8x256xf32>,
    return
  }
  func.func @transform_0(%arg0: i32) -> (i32, i32, i32) {
    %c0_i32 = arith.constant 0 : i32
    %c0_i32_0 = arith.constant 0 : i32
    %c0_i32_1 = arith.constant 0 : i32
    return %arg0, %c0_i32, %c0_i32_0 : i32, i32, i32
  }
  func.func @transform_1(%arg0: i32) -> (i32, i32) {
    %c0_i32 = arith.constant 0 : i32
    %c0_i32_0 = arith.constant 0 : i32
    %c0_i32_1 = arith.constant 0 : i32
    return %c0_i32, %c0_i32_0 : i32, i32
  }
  func.func @transform_2(%arg0: i32) -> (i32, i32, i32) {
    %c0_i32 = arith.constant 0 : i32
    %c0_i32_0 = arith.constant 0 : i32
    %c0_i32_1 = arith.constant 0 : i32
    return %arg0, %c0_i32, %c0_i32_0 : i32, i32, i32
  }
}

</mosaic_0001>

<llo_original>
// kernel: tpu_custom_call.1
$region0: #{tpu_custom_call.1}
  #allocation0 [shape = 'u32[]', space=smem, size = 0x4, offset = 0x4, fixed_abs, tag = 'smem constant byte address 0x4 - core index']
  #allocation1 [shape = 'u32[144,128]{1,0:T(1,128)}', space=vmem, size = 0x12000, scoped, tag = 'internal scratch']
  %s0 = inlined_call_operand.vmem [shape: f32[2,37,256], index: 0, kind: input, shape index: {}]
  %s1 = inlined_call_operand.vmem [shape: f32[8,37], index: 1, kind: input, shape index: {}]
  %s2 = inlined_call_operand.hbm [shape: f32[2,8,256], index: 2, kind: output, shape index: {}]
  %s3 = sld [smem:[#allocation0]]
  $region41: #{tpu_custom_call.1} parent=0
    _
  %s5 = ssub.s32 1, %s3
  %s6 = scalar_select 0, %s5, %s3
  $region1: #{tpu_custom_call.1} parent=0
    #allocation2 [shape = 'u8[16384]{0}', space=vmem, size = 0x4000, scoped, tag = 'output window, operand 0']
    #allocation3 [shape = 's32[2]{0}', space=sflag, size = 0x8, scoped, tag = 'scoped memory for tpu_custom_call.1']
    %7 = vsyncpa [#allocation3], 0
    %s8 = scalar_lea.sflag [#allocation3], 1
    %9 = vsyncpa %s8, 0
    loop: start=0, step=1, limit=4
    $region2: #{tpu_custom_call.1} parent=1 // loop_pre_header
      _
    $region3: #{tpu_custom_call.1} parent=1 // loop_header
      %s11 = sphi 0, %s15
      %p12 = scmp.ge.s32.totalorder %s11, 4
      %s21 = sphi 0, %s23
      %s24 = sphi 0, %s21
      %s25 = sphi 0, %s24
      %s41 = sphi 0, %s25
      %s45 = sphi 0, %s45
      %s47 = sphi 0, %s45
      %s48 = sphi 0, %s47
      %s62 = sphi 0, %s48
      %s68 = sphi 0, %s70
      %s71 = sphi 0, %s68
      %s72 = sphi 0, %s71
      %s88 = sphi 0, %s72
    $region4: #{tpu_custom_call.1} parent=1 // loop_header_branch
      %14 = sbr.rel (%p12) target = $region8
    $region5: #{tpu_custom_call.1} parent=1 // loop_body
      %s16 = ssub.s32 %s11, 1
      %s17 = ssub.s32 %s11, 2
      %s18 = sadd.s32 %s11, 1
      %s19 = ssub.s32 %s11, %s18
      %p20 = scmp.eq.s32.totalorder %s19, 0
      %s22 = sadd.s32 %s21, 1
      %s23 = scalar_select %p20, %s21, %s22
      %p26 = pneg %p20
      %p27 = scmp.eq.s32.totalorder %s11, 1
      %p28 = por %p26, %p27
      %p29 = scmp.ne.s32.totalorder %s21, %s24
      %p30 = scmp.eq.s32.totalorder %s11, 0
      %p31 = por %p29, %p30
      %p32 = scmp.ne.s32.totalorder %s21, %s24
      %p33 = scmp.eq.s32.totalorder %s16, 1
      %p34 = por %p32, %p33
      %p35 = scmp.ne.s32.totalorder %s24, %s25
      %p36 = scmp.eq.s32.totalorder %s16, 0
      %p37 = por %p35, %p36
      %p38 = scmp.ne.s32.totalorder %s24, %s25
      %p39 = scmp.eq.s32.totalorder %s17, 1
      %p40 = por %p38, %p39
      %p42 = scmp.ne.s32.totalorder %s25, %s41
      %p43 = scmp.eq.s32.totalorder %s17, 0
      %p44 = por %p42, %p43
      %s46 = sadd.s32 %s45, 1
      %p49 = scmp.eq.s32.totalorder %s11, 1
      %p50 = scmp.ne.s32.totalorder %s45, %s47
      %p51 = scmp.eq.s32.totalorder %s11, 0
      %p52 = por %p50, %p51
      %p53 = scmp.ne.s32.totalorder %s45, %s47
      %p54 = scmp.eq.s32.totalorder %s16, 1
      %p55 = por %p53, %p54
      %p56 = scmp.ne.s32.totalorder %s47, %s48
      %p57 = scmp.eq.s32.totalorder %s16, 0
      %p58 = por %p56, %p57
      %p59 = scmp.ne.s32.totalorder %s47, %s48
      %p60 = scmp.eq.s32.totalorder %s17, 1
      %p61 = por %p59, %p60
      %p63 = scmp.ne.s32.totalorder %s48, %s62
      %p64 = scmp.eq.s32.totalorder %s17, 0
      %p65 = por %p63, %p64
      %s66 = ssub.s32 %s11, %s18
      %p67 = scmp.eq.s32.totalorder %s66, 0
      %s69 = sadd.s32 %s68, 1
      %s70 = scalar_select %p67, %s68, %s69
      %p73 = pneg %p67
      %p74 = scmp.eq.s32.totalorder %s11, 1
      %p75 = por %p73, %p74
      %p76 = scmp.ne.s32.totalorder %s68, %s71
      %p77 = scmp.eq.s32.totalorder %s11, 0
      %p78 = por %p76, %p77
      %p79 = scmp.ne.s32.totalorder %s68, %s71
      %p80 = scmp.eq.s32.totalorder %s16, 1
      %p81 = por %p79, %p80
      %p82 = scmp.ne.s32.totalorder %s71, %s72
      %p83 = scmp.eq.s32.totalorder %s16, 0
      %p84 = por %p82, %p83
      %p85 = scmp.ne.s32.totalorder %s71, %s72
      %p86 = scmp.eq.s32.totalorder %s17, 1
      %p87 = por %p85, %p86
      %p89 = scmp.ne.s32.totalorder %s72, %s88
      %p90 = scmp.eq.s32.totalorder %s17, 0
      %p91 = por %p89, %p90
      %p92 = scmp.le.s32.totalorder 1, %s11
      %p93 = scmp.lt.s32.totalorder %s11, 3
      %p94 = pnand %p92, %p93
      %p95 = pneg %p94
      // Predicated region
      $region9: #{tpu_custom_call.1} parent=5 // pred_check
        _
      $region10: #{tpu_custom_call.1} parent=5 // pred_check_branch
        %97 = sbr.rel (%p94) target = $region12
      $region11: #{tpu_custom_call.1} parent=5 // pred_region
        %s98 = ssub.s32 %s11, 1
        // Predicated region
        $region13: #{tpu_custom_call.1} parent=11 // pred_check
          %p99 = pneg %p58
        $region14: #{tpu_custom_call.1} parent=11 // pred_check_branch
          %101 = sbr.rel (%p99) target = $region16
        $region15: #{tpu_custom_call.1} parent=11 // pred_region
          _
        $region16: #{tpu_custom_call.1} parent=11 // pred_fallthru
          _
      $region12: #{tpu_custom_call.1} parent=5 // pred_fallthru
        _
      %p102 = scmp.lt.s32.totalorder %s11, 2
      // Predicated region
      $region17: #{tpu_custom_call.1} parent=5 // pred_check
        %p103 = pneg %p102
      $region18: #{tpu_custom_call.1} parent=5 // pred_check_branch
        %105 = sbr.rel (%p103) target = $region20
      $region19: #{tpu_custom_call.1} parent=5 // pred_region
        // Predicated region
        $region21: #{tpu_custom_call.1} parent=19 // pred_check
          %p106 = pneg %p31
        $region22: #{tpu_custom_call.1} parent=19 // pred_check_branch
          %108 = sbr.rel (%p106) target = $region24
        $region23: #{tpu_custom_call.1} parent=19 // pred_region
          %p109 = scmp.lt.s32.totalorder %s11, 1
          %s110 = scalar_select %p109, %s11, 1
          %s111 = smul.addr %s110, 10
          %s112 = smul.addr %s111, 8
          %s113 = scalar_lea.vmem %s0, %s112
        $region24: #{tpu_custom_call.1} parent=19 // pred_fallthru
          _
      $region20: #{tpu_custom_call.1} parent=5 // pred_fallthru
        _
      %p114 = scmp.le.s32.totalorder 1, %s11
      %p115 = scmp.lt.s32.totalorder %s11, 3
      %p116 = pnand %p114, %p115
      %p117 = pneg %p116
      // Predicated region
      $region25: #{tpu_custom_call.1} parent=5 // pred_check
        _
      $region26: #{tpu_custom_call.1} parent=5 // pred_check_branch
        %119 = sbr.rel (%p116) target = $region28
      $region27: #{tpu_custom_call.1} parent=5 // pred_region
        %s120 = ssub.s32 %s11, 1
        %p121 = scmp.lt.s32.totalorder %s16, 1
        %s122 = scalar_select %p121, %s16, 1
        %s123 = smul.addr %s122, 10
        %s124 = smul.addr %s123, 8
        %s125 = scalar_lea.vmem %s0, %s124
        %p126 = pneg %p37
        %p127 = pneg %p34
        %p128 = pneg %p58
        %p129 = pneg %p55
        %p130 = pneg %p84
        %p131 = pneg %p81
        %s132 = sand.u32 %s71, 1
        %s133 = scalar_lea.sflag [#allocation3], %s132
        %s134 = sand.u32 %s71, 1
        %s135 = smul.addr %s134, 16
        %s136 = scalar_lea.vmem [#allocation2], %s135
        %p137 = scmp.lt.s32.totalorder %s16, 1
        %s138 = scalar_select %p137, %s16, 1
        %s139 = smul.addr %s138, 10
        %s140 = smul.addr %s139, 8
        %s141 = scalar_lea.vmem %s0, %s140
        %v142 = vld [vmem:[%s1] sm:$0xff]
        %v143 = vld [vmem:[%s141] sm:$0xff]
        %v144 = vld [vmem:[%s141 + $0x8] sm:$0xff]
        %v145 = vld [vmem:[%s141 + $0x10] sm:$0xff]
        %v146 = vld [vmem:[%s141 + $0x18] sm:$0xff]
        %v147 = vld [vmem:[%s141 + $0x20] sm:$0xff]
        %v148 = vld [vmem:[%s141 + $0x28] sm:$0xff]
        %v149 = vld [vmem:[%s141 + $0x30] sm:$0xff]
        %v150 = vld [vmem:[%s141 + $0x38] sm:$0xff]
        %v151 = vld [vmem:[%s141 + $0x40] sm:$0x1f]
        %v152 = vld [vmem:[%s141 + $0x48] sm:$0x1f]
        %vm153 = vcmask 302080
        %v155 = vsel %vm153, %v142, 0
        %vm157 = vcmask 1044480
        %v159 = vsel %vm157, %v151, 0
        %v162 = vsel %vm157, %v152, 0
        %164 = vmatprep.subr.mxu0 %v144
        %165 = vmatpush1.msra.mxu0 %v143
        %166 = vmatprep.subr.mxu0 %v146
        %167 = vmatpush1.msra.mxu0 %v145
        %168 = vmatprep.subr.mxu0 %v148
        %169 = vmatpush1.msra.mxu0 %v147
        %170 = vmatprep.subr.mxu0 %v150
        %171 = vmatpush1.msra.mxu0 %v149
        %172 = vmatprep.subr.mxu0 %v162
        %173 = vmatpush1.msra.mxu0 %v159
        %174 = vmatprep.subr.mxu0 0.0
        %175 = vmatpush1.msra.mxu0 0.0
        %176 = vmatprep.subr.mxu0 0.0
        %177 = vmatpush1.msra.mxu0 0.0
        %178 = vmatprep.subr.mxu0 0.0
        %179 = vmatpush1.msra.mxu0 0.0
        %180 = vmatprep.subr.mxu0 0.0
        %181 = vmatpush1.msra.mxu0 0.0
        %182 = vmatprep.subr.mxu0 0.0
        %183 = vmatpush1.msra.mxu0 0.0
        %184 = vmatprep.subr.mxu0 0.0
        %185 = vmatpush1.msra.mxu0 0.0
        %186 = vmatprep.subr.mxu0 0.0
        %187 = vmatpush1.msra.mxu0 0.0
        %188 = vmatprep.subr.mxu0 0.0
        %189 = vmatpush1.msra.mxu0 0.0
        %190 = vmatprep.subr.mxu0 0.0
        %191 = vmatpush1.msra.mxu0 0.0
        %192 = vmatprep.subr.mxu0 0.0
        %193 = vmatpush1.msra.mxu0 0.0
        %194 = vmatprep.subr.mxu0 0.0
        %195 = vmatpush1.msra.mxu0 0.0
        %196 = vmatprep.subr.mxu0 0.0
        %197 = vmatpush1.msra.mxu0 0.0
        %198 = vmatprep.subr.mxu0 0.0
        %199 = vmatpush1.msra.mxu0 0.0
        %200 = vmatprep.subr.mxu0 0.0
        %201 = vmatpush1.msra.mxu0 0.0
        %202 = vmatprep.subr.mxu0 0.0
        %203 = vmatpush1.msra.mxu0 0.0
        %204 = vmatprep.subr.mxu0 0.0
        %205 = vmatpush1.msra.mxu0 0.0
        %206 = vmatprep.subr.mxu0 0.0
        %207 = vmatpush1.msra.mxu0 0.0
        %208 = vmatprep.subr.mxu0 0.0
        %209 = vmatpush1.msra.mxu0 0.0
        %210 = vmatprep.subr.mxu0 0.0
        %211 = vmatpush1.msra.mxu0 0.0
        %212 = vmatprep.subr.mxu0 0.0
        %213 = vmatpush1.msra.mxu0 0.0
        %214 = vmatprep.subr.mxu0 0.0
        %215 = vmatpush1.msra.mxu0 0.0
        %216 = vmatprep.subr.mxu0 0.0
        %217 = vmatpush1.msra.mxu0 0.0
        %218 = vmatprep.subr.mxu0 0.0
        %219 = vmatpush1.msra.mxu0 0.0
        %220 = vmatprep.subr.mxu0 0.0
        %221 = vmatpush1.msra.mxu0 0.0
        %222 = vmatprep.subr.mxu0 0.0
        %223 = vmatpush1.msra.mxu0 0.0
        %224 = vmatprep.subr.mxu0 0.0
        %225 = vmatpush1.msra.mxu0 0.0
        %226 = vmatprep.subr.mxu0 0.0
        %227 = vmatpush1.msra.mxu0 0.0
        %228 = vmatprep.mubr.f32.mxu0 0.0
        %229 = vmatmul.mubr.f32.gmra.mrb[0].mxu0 %v155
        %v230 = vpop.f32.mrb[0].mxu0
        %v231 = vadd.f32 0.0, %v230
        %v232 = vpop.f32.mrb[0].mxu0
        %v233 = vadd.f32 0.0, %v232
        %234 = vdwg.mxu0
        %v235 = vmax.f32 %v231, 0.0
        %v236 = vmax.f32 %v233, 0.0
        %237 = vst [vmem:[%s136] sm:$0xff] %v235
        %238 = vst [vmem:[%s136 + $0x8] sm:$0xff] %v236
        %s239 = sand.u32 %s71, 1
        %s240 = scalar_lea.sflag [#allocation3], %s239
        %s241 = sand.u32 %s71, 1
        %s242 = smul.addr %s241, 16
        %s243 = scalar_lea.vmem [#allocation2], %s242
        // Predicated region
        $region29: #{tpu_custom_call.1} parent=27 // pred_check
          %p244 = pneg %p81
        $region30: #{tpu_custom_call.1} parent=27 // pred_check_branch
          %246 = sbr.rel (%p244) target = $region32
        $region31: #{tpu_custom_call.1} parent=27 // pred_region
          %s248 = ssub.s32 256, 256
          %249 = vsyncadd %s240, %s248
          %s250 = smul.addr %s16, 2
          %s251 = smul.addr %s250, 128
          %s252 = scalar_lea.hbm %s2, %s251
          %s254 = sshll.u32 %s243, 4
          %s255 = int_to_ptr.vmem [resolvable:$true] %s254
          %257 = dma.vmem_to_hbm [thread:$0]  %s255, 256, %s252, %s240
        $region32: #{tpu_custom_call.1} parent=27 // pred_fallthru
          _
      $region28: #{tpu_custom_call.1} parent=5 // pred_fallthru
        _
      %p258 = scmp.le.s32.totalorder 2, %s11
      // Predicated region
      $region33: #{tpu_custom_call.1} parent=5 // pred_check
        %p259 = pneg %p258
      $region34: #{tpu_custom_call.1} parent=5 // pred_check_branch
        %261 = sbr.rel (%p259) target = $region36
      $region35: #{tpu_custom_call.1} parent=5 // pred_region
        %s262 = ssub.s32 %s11, 2
        // Predicated region
        $region37: #{tpu_custom_call.1} parent=35 // pred_check
          %p263 = pneg %p87
        $region38: #{tpu_custom_call.1} parent=35 // pred_check_branch
          %265 = sbr.rel (%p263) target = $region40
        $region39: #{tpu_custom_call.1} parent=35 // pred_region
          %s266 = sand.u32 %s72, 1
          %s267 = scalar_lea.sflag [#allocation3], %s266
          %s268 = sand.u32 %s72, 1
          %s269 = smul.addr %s268, 16
          %s270 = scalar_lea.vmem [#allocation2], %s269
          %271 = dma.done %s267, 256
        $region40: #{tpu_custom_call.1} parent=35 // pred_fallthru
          _
      $region36: #{tpu_custom_call.1} parent=5 // pred_fallthru
        _
    $region6: #{tpu_custom_call.1} parent=1 // loop_footer
      %s15 = sadd.s32 1, %s11
    $region7: #{tpu_custom_call.1} parent=1 // loop_footer_branch
      %10 = sbr.rel target = $region3
    $region8: #{tpu_custom_call.1} parent=1 // loop_exit
      _
    %272 = vsyncpa [#allocation3], 1
    %s273 = scalar_lea.sflag [#allocation3], 1
    %274 = vsyncpa %s273, 1

</llo_original>
